<compile_context>
chip_gen: v7x
topology: tpu7x:2x2x1
jax: 0.10.0
libtpu: 0.0.40
codegen_flags: <defaults>
</compile_context>

<pallas_src>
import jax
import jax.numpy as jnp
from jax.experimental import pallas as pl
from jax.experimental.pallas import tpu as pltpu


def _ffn_kernel(x_ref, w1_ref, b1_ref, w2_ref, b2_ref, o_ref, acc_ref):
    j = pl.program_id(1)

    @pl.when(j == 0)
    def _():
        acc_ref[...] = jnp.zeros_like(acc_ref)

    # First matmul + bias + ReLU, all on the current hidden-dim slice.
    h = jnp.dot(x_ref[...], w1_ref[...], preferred_element_type=jnp.float32)
    h = jnp.maximum(h + b1_ref[...], 0.0)

    # Second matmul: accumulate this hidden slice's contribution to the output tile.
    acc_ref[...] += jnp.dot(
        h.astype(w2_ref.dtype), w2_ref[...], preferred_element_type=jnp.float32
    )

    @pl.when(j == pl.num_programs(1) - 1)
    def _():
        o_ref[...] = (acc_ref[...] + b2_ref[...]).astype(o_ref.dtype)


def _largest_tile(n, candidates):
    for c in candidates:
        if n % c == 0:
            return c
    return n  # fall back to the full (un-tiled) dimension


def feed_forward(x, w1, b1, w2, b2, *, tm=None, th=None):
    """x: (B, S, D).  w1: (D, 4D), b1: (4D,), w2: (4D, D), b2: (D,)."""
    B, S, D = x.shape
    H = w1.shape[1]
    assert w1.shape == (D, H) and w2.shape == (H, D)
    assert b1.shape == (H,) and b2.shape == (D,)

    M = B * S
    x2d = x.reshape(M, D)                    # glue reshape (no data movement in HBM)
    b1_2d = b1.reshape(1, H)
    b2_2d = b2.reshape(1, D)

    if tm is None:
        tm = _largest_tile(M, [256, 128, 64, 32, 16, 8])
    if th is None:
        th = _largest_tile(H, [512, 256, 128])

    grid = (M // tm, H // th)

    itemsize = jnp.dtype(x.dtype).itemsize
    cost = pl.CostEstimate(
        flops=4 * M * D * H,                 # two matmuls, 2*M*D*H flops each
        transcendentals=0,
        bytes_accessed=itemsize * (2 * M * D + 2 * D * H + H + D),
    )

    out2d = pl.pallas_call(
        _ffn_kernel,
        out_shape=jax.ShapeDtypeStruct((M, D), x.dtype),
        grid_spec=pltpu.PrefetchScalarGridSpec(
            num_scalar_prefetch=0,
            grid=grid,
            in_specs=[
                pl.BlockSpec((tm, D), lambda i, j: (i, 0)),   # x tile, resident over j
                pl.BlockSpec((D, th), lambda i, j: (0, j)),   # W1 column block
                pl.BlockSpec((1, th), lambda i, j: (0, j)),   # b1 slice
                pl.BlockSpec((th, D), lambda i, j: (j, 0)),   # W2 row block
                pl.BlockSpec((1, D), lambda i, j: (0, 0)),    # b2 (resident)
            ],
            out_specs=pl.BlockSpec((tm, D), lambda i, j: (i, 0)),
            scratch_shapes=[pltpu.VMEM((tm, D), jnp.float32)],
        ),
        compiler_params=pltpu.CompilerParams(
            dimension_semantics=("parallel", "arbitrary"),
        ),
        cost_estimate=cost,
    )(x2d, w1, b1_2d, w2, b2_2d)

    return out2d.reshape(B, S, D)


def init_feed_forward_params(key, d_model, dtype=jnp.float32):
    """Create W1/b1/W2/b2 matching nn.Linear(d_model, 4*d_model) / nn.Linear(4*d_model, d_model).
    Stored as (in, out) so the kernel computes x @ W + b (same math as PyTorch's x @ W.T + b)."""
    h = 4 * d_model
    k1, k2, k3, k4 = jax.random.split(key, 4)
    lim1 = 1.0 / jnp.sqrt(d_model)
    lim2 = 1.0 / jnp.sqrt(h)
    w1 = jax.random.uniform(k1, (d_model, h), dtype, minval=-lim1, maxval=lim1)
    b1 = jax.random.uniform(k2, (h,), dtype, minval=-lim1, maxval=lim1)
    w2 = jax.random.uniform(k3, (h, d_model), dtype, minval=-lim2, maxval=lim2)
    b2 = jax.random.uniform(k4, (d_model,), dtype, minval=-lim2, maxval=lim2)
    return w1, b1, w2, b2


if __name__ == "__main__":
    # Small shapes consistent with the module's forward: (batch, seq, d_model)
    B, S, D = 2, 8, 128   # hidden = 4*D = 512

    key = jax.random.PRNGKey(0)
    kx, kp = jax.random.split(key)
    x = jax.random.normal(kx, (B, S, D), dtype=jnp.float32)
    w1, b1, w2, b2 = init_feed_forward_params(kp, D, dtype=jnp.float32)

    out = feed_forward(x, w1, b1, w2, b2)
    out = jax.block_until_ready(out)

    # sanity check vs pure-JAX reference (silent unless it fails)
    x2d = x.reshape(B * S, D)
    ref = (jnp.maximum(x2d @ w1 + b1, 0.0) @ w2 + b2).reshape(B, S, D)
    assert out.shape == (B, S, D)
    assert jnp.allclose(out, ref, atol=1e-4, rtol=1e-4), "mismatch vs reference"

    print("KERNEL_OK")
</pallas_src>

<mosaic_0001>
module attributes {stable_mosaic.version = 11 : i64} {
  func.func @_ffn_kernel(%arg0: i32, %arg1: i32, %arg2: memref<16x128xf32, #tpu.memory_space<vmem>>, %arg3: memref<128x512xf32, #tpu.memory_space<vmem>>, %arg4: memref<1x512xf32, #tpu.memory_space<vmem>>, %arg5: memref<512x128xf32, #tpu.memory_space<vmem>>, %arg6: memref<1x128xf32, #tpu.memory_space<vmem>>, %arg7: memref<16x128xf32, #tpu.memory_space<vmem>>, %arg8: memref<16x128xf32, #tpu.memory_space<vmem>>) attributes {dimension_semantics = [#tpu.dimension_semantics<parallel>, #tpu.dimension_semantics<arbitrary>], iteration_bounds = array<i64: 1, 1>, scalar_prefetch = 0 : i64, scratch_operands = 1 : i64, tpu.core_type = #tpu.core_type<tc>, window_params = [{transform_indices = @transform_0, window_bounds = array<i64: 16, 128>}, {transform_indices = @transform_1, window_bounds = array<i64: 128, 512>}, {transform_indices = @transform_2, window_bounds = array<i64: 1, 512>}, {transform_indices = @transform_3, window_bounds = array<i64: 512, 128>}, {pipeline_mode = #tpu.pipeline_mode<synchronous>, transform_indices = @transform_4, window_bounds = array<i64: 1, 128>}, {transform_indices = @transform_5, window_bounds = array<i64: 16, 128>}]} {
    %c0_i32 = arith.constant 0 : i32
    %0 = arith.cmpi eq, %arg1, %c0_i32 : i32
    %1 = arith.extui %0 : i1 to i32
    %c0_i32_0 = arith.constant 0 : i32
    %2 = arith.cmpi ne, %1, %c0_i32_0 : i32
    scf.if %2 {
      %cst_16 = arith.constant 0.000000e+00 : f32
      %19 = vector.broadcast %cst_16 : f32 to vector<16x128xf32>
      %c0_17 = arith.constant 0 : index
      %c0_18 = arith.constant 0 : index
      %20 = vector.load %arg8[%c0_17, %c0_18] : memref<16x128xf32, #tpu.memory_space<vmem>>, vector<16x128xf32>
      tpu.vector_store %arg8[%c0_17, %c0_18], %19 {strides = array<i32>} : memref<16x128xf32, #tpu.memory_space<vmem>>, vector<16x128xf32>,
    } else {
    }
    %c0 = arith.constant 0 : index
    %c0_1 = arith.constant 0 : index
    %3 = vector.load %arg2[%c0, %c0_1] : memref<16x128xf32, #tpu.memory_space<vmem>>, vector<16x128xf32>
    %c0_2 = arith.constant 0 : index
    %c0_3 = arith.constant 0 : index
    %4 = vector.load %arg3[%c0_2, %c0_3] : memref<128x512xf32, #tpu.memory_space<vmem>>, vector<128x512xf32>
    %cst = arith.constant dense<0.000000e+00> : vector<16x512xf32>
    %5 = tpu.matmul %3, %4, %cst {dimension_numbers = #tpu.dot_dimension_numbers<[1], [0], [0], [1], [0, 0, 1, 1], [], []>} : vector<16x128xf32>, vector<128x512xf32>, vector<16x512xf32> -> vector<16x512xf32>
    %c0_4 = arith.constant 0 : index
    %c0_5 = arith.constant 0 : index
    %6 = vector.load %arg4[%c0_4, %c0_5] : memref<1x512xf32, #tpu.memory_space<vmem>>, vector<1x512xf32>
    %7 = vector.broadcast %6 : vector<1x512xf32> to vector<16x512xf32>
    %8 = arith.addf %5, %7 : vector<16x512xf32>
    %cst_6 = arith.constant 0.000000e+00 : f32
    %9 = vector.broadcast %cst_6 : f32 to vector<16x512xf32>
    %10 = arith.maximumf %8, %9 : vector<16x512xf32>
    %c0_7 = arith.constant 0 : index
    %c0_8 = arith.constant 0 : index
    %11 = vector.load %arg8[%c0_7, %c0_8] : memref<16x128xf32, #tpu.memory_space<vmem>>, vector<16x128xf32>
    %c0_9 = arith.constant 0 : index
    %c0_10 = arith.constant 0 : index
    %12 = vector.load %arg5[%c0_9, %c0_10] : memref<512x128xf32, #tpu.memory_space<vmem>>, vector<512x128xf32>
    %cst_11 = arith.constant dense<0.000000e+00> : vector<16x128xf32>
    %13 = tpu.matmul %10, %12, %cst_11 {dimension_numbers = #tpu.dot_dimension_numbers<[1], [0], [0], [1], [0, 0, 1, 1], [], []>} : vector<16x512xf32>, vector<512x128xf32>, vector<16x128xf32> -> vector<16x128xf32>
    %14 = arith.addf %11, %13 : vector<16x128xf32>
    %c0_12 = arith.constant 0 : index
    %c0_13 = arith.constant 0 : index
    %15 = vector.load %arg8[%c0_12, %c0_13] : memref<16x128xf32, #tpu.memory_space<vmem>>, vector<16x128xf32>
    tpu.vector_store %arg8[%c0_12, %c0_13], %14 {strides = array<i32>} : memref<16x128xf32, #tpu.memory_space<vmem>>, vector<16x128xf32>,
    %c0_i32_14 = arith.constant 0 : i32
    %16 = arith.cmpi eq, %arg1, %c0_i32_14 : i32
    %17 = arith.extui %16 : i1 to i32
    %c0_i32_15 = arith.constant 0 : i32
    %18 = arith.cmpi ne, %17, %c0_i32_15 : i32
    scf.if %18 {
      %c0_16 = arith.constant 0 : index
      %c0_17 = arith.constant 0 : index
      %19 = vector.load %arg8[%c0_16, %c0_17] : memref<16x128xf32, #tpu.memory_space<vmem>>, vector<16x128xf32>
      %c0_18 = arith.constant 0 : index
      %c0_19 = arith.constant 0 : index
      %20 = vector.load %arg6[%c0_18, %c0_19] : memref<1x128xf32, #tpu.memory_space<vmem>>, vector<1x128xf32>
      %21 = vector.broadcast %20 : vector<1x128xf32> to vector<16x128xf32>
      %22 = arith.addf %19, %21 : vector<16x128xf32>
      %c0_20 = arith.constant 0 : index
      %c0_21 = arith.constant 0 : index
      %23 = vector.load %arg7[%c0_20, %c0_21] : memref<16x128xf32, #tpu.memory_space<vmem>>, vector<16x128xf32>
      tpu.vector_store %arg7[%c0_20, %c0_21], %22 {strides = array<i32>} : memref<16x128xf32, #tpu.memory_space<vmem>>, vector<16x128xf32>,
    } else {
    }
    return
  }
  func.func @transform_0(%arg0: i32, %arg1: i32) -> (i32, i32) {
    %c0_i32 = arith.constant 0 : i32
    %c0_i32_0 = arith.constant 0 : i32
    return %arg0, %c0_i32 : i32, i32
  }
  func.func @transform_1(%arg0: i32, %arg1: i32) -> (i32, i32) {
    %c0_i32 = arith.constant 0 : i32
    %c0_i32_0 = arith.constant 0 : i32
    return %c0_i32, %arg1 : i32, i32
  }
  func.func @transform_2(%arg0: i32, %arg1: i32) -> (i32, i32) {
    %c0_i32 = arith.constant 0 : i32
    %c0_i32_0 = arith.constant 0 : i32
    return %c0_i32, %arg1 : i32, i32
  }
  func.func @transform_3(%arg0: i32, %arg1: i32) -> (i32, i32) {
    %c0_i32 = arith.constant 0 : i32
    %c0_i32_0 = arith.constant 0 : i32
    return %arg1, %c0_i32 : i32, i32
  }
  func.func @transform_4(%arg0: i32, %arg1: i32) -> (i32, i32) {
    %c0_i32 = arith.constant 0 : i32
    %c0_i32_0 = arith.constant 0 : i32
    %c0_i32_1 = arith.constant 0 : i32
    return %c0_i32, %c0_i32_0 : i32, i32
  }
  func.func @transform_5(%arg0: i32, %arg1: i32) -> (i32, i32) {
    %c0_i32 = arith.constant 0 : i32
    %c0_i32_0 = arith.constant 0 : i32
    return %arg0, %c0_i32 : i32, i32
  }
}

</mosaic_0001>

<llo_original>
// kernel: tpu_custom_call.1
$region0: #{tpu_custom_call.1}
  #allocation0 [shape = 'u32[]', space=smem, size = 0x4, offset = 0x4, fixed_abs, tag = 'smem constant byte address 0x4 - core index']
  #allocation1 [shape = 'u32[144,128]{1,0:T(1,128)}', space=vmem, size = 0x12000, scoped, tag = 'internal scratch']
  #allocation2 [shape = 'f32[16,128]{1,0:T(8,128)}', space=vmem, size = 0x2000, scoped, tag = 'scratch operand']
  %s0 = inlined_call_operand.hbm [shape: f32[16,128], index: 0, kind: input, shape index: {}]
  %s1 = inlined_call_operand.hbm [shape: f32[128,512], index: 1, kind: input, shape index: {}]
  %s2 = inlined_call_operand.vmem [shape: f32[1,512], index: 2, kind: input, shape index: {}]
  %s3 = inlined_call_operand.hbm [shape: f32[512,128], index: 3, kind: input, shape index: {}]
  %s4 = inlined_call_operand.vmem [shape: f32[1,128], index: 4, kind: input, shape index: {}]
  %s5 = inlined_call_operand.hbm [shape: f32[16,128], index: 5, kind: output, shape index: {}]
  %s6 = sld [smem:[#allocation0]]
  $region50: #{tpu_custom_call.1} parent=0
    _
  %s8 = ssub.s32 1, %s6
  %s9 = scalar_select 0, %s8, %s6
  $region1: #{tpu_custom_call.1} parent=0
    #allocation3 [shape = 'u8[8192]{0}', space=vmem, size = 0x2000, scoped, tag = 'input window, operand 0, single buffered']
    #allocation4 [shape = 's32[1]{0}', space=sflag, size = 0x4, scoped, tag = 'scoped memory for tpu_custom_call.1']
    #allocation5 [shape = 's32[1]{0}', space=sflag, size = 0x4, scoped, tag = 'scoped memory for tpu_custom_call.1']
    #allocation6 [shape = 'u8[262144]{0}', space=vmem, size = 0x40000, scoped, tag = 'input window, operand 1, single buffered']
    #allocation7 [shape = 's32[1]{0}', space=sflag, size = 0x4, scoped, tag = 'scoped memory for tpu_custom_call.1']
    #allocation8 [shape = 'u8[262144]{0}', space=vmem, size = 0x40000, scoped, tag = 'input window, operand 3, single buffered']
    #allocation9 [shape = 'u8[8192]{0}', space=vmem, size = 0x2000, scoped, tag = 'output window, operand 0, single buffered']
    %10 = vsyncpa [#allocation4], 0
    %11 = vsyncpa [#allocation7], 0
    %12 = vsyncpa [#allocation5], 0
    // Predicated region
    $region2: #{tpu_custom_call.1} parent=1 // pred_check
      _
    $region3: #{tpu_custom_call.1} parent=1 // pred_check_branch
      %14 = sbr.rel (0) target = $region5
    $region4: #{tpu_custom_call.1} parent=1 // pred_region
      %s16 = ssub.s32 256, 256
      %17 = vsyncadd [#allocation4], %s16
      %s18 = sshll.u32 [#allocation3], 4
      %s19 = int_to_ptr.vmem [resolvable:$true] %s18
      %24 = dma.hbm_to_vmem [thread:$0]  %s0, 256, %s19, [#allocation4], 128, 128, 8
    $region5: #{tpu_custom_call.1} parent=1 // pred_fallthru
      _
    // Predicated region
    $region6: #{tpu_custom_call.1} parent=1 // pred_check
      _
    $region7: #{tpu_custom_call.1} parent=1 // pred_check_branch
      %26 = sbr.rel (0) target = $region9
    $region8: #{tpu_custom_call.1} parent=1 // pred_region
      %s28 = ssub.s32 8192, 8192
      %29 = vsyncadd [#allocation7], %s28
      %s30 = sshll.u32 [#allocation6], 4
      %s31 = int_to_ptr.vmem [resolvable:$true] %s30
      %36 = dma.hbm_to_vmem [thread:$0]  %s1, 8192, %s31, [#allocation7], 512, 512, 32
    $region9: #{tpu_custom_call.1} parent=1 // pred_fallthru
      _
    // Predicated region
    $region10: #{tpu_custom_call.1} parent=1 // pred_check
      _
    $region11: #{tpu_custom_call.1} parent=1 // pred_check_branch
      %38 = sbr.rel (0) target = $region13
    $region12: #{tpu_custom_call.1} parent=1 // pred_region
      _
    $region13: #{tpu_custom_call.1} parent=1 // pred_fallthru
      _
    // Predicated region
    $region14: #{tpu_custom_call.1} parent=1 // pred_check
      _
    $region15: #{tpu_custom_call.1} parent=1 // pred_check_branch
      %40 = sbr.rel (0) target = $region17
    $region16: #{tpu_custom_call.1} parent=1 // pred_region
      %s42 = ssub.s32 8192, 8192
      %43 = vsyncadd [#allocation7], %s42
      %s44 = sshll.u32 [#allocation8], 4
      %s45 = int_to_ptr.vmem [resolvable:$true] %s44
      %50 = dma.hbm_to_vmem [thread:$0]  %s3, 8192, %s45, [#allocation7], 128, 128, 8
    $region17: #{tpu_custom_call.1} parent=1 // pred_fallthru
      _
    // Predicated region
    $region18: #{tpu_custom_call.1} parent=1 // pred_check
      _
    $region19: #{tpu_custom_call.1} parent=1 // pred_check_branch
      %52 = sbr.rel (0) target = $region21
    $region20: #{tpu_custom_call.1} parent=1 // pred_region
      _
    $region21: #{tpu_custom_call.1} parent=1 // pred_fallthru
      _
    // Predicated region
    $region22: #{tpu_custom_call.1} parent=1 // pred_check
      _
    $region23: #{tpu_custom_call.1} parent=1 // pred_check_branch
      %54 = sbr.rel (0) target = $region25
    $region24: #{tpu_custom_call.1} parent=1 // pred_region
      %55 = dma.done [#allocation4], 256
    $region25: #{tpu_custom_call.1} parent=1 // pred_fallthru
      _
    // Predicated region
    $region26: #{tpu_custom_call.1} parent=1 // pred_check
      _
    $region27: #{tpu_custom_call.1} parent=1 // pred_check_branch
      %57 = sbr.rel (0) target = $region29
    $region28: #{tpu_custom_call.1} parent=1 // pred_region
      %58 = dma.done [#allocation7], 8192
    $region29: #{tpu_custom_call.1} parent=1 // pred_fallthru
      _
    // Predicated region
    $region30: #{tpu_custom_call.1} parent=1 // pred_check
      _
    $region31: #{tpu_custom_call.1} parent=1 // pred_check_branch
      %60 = sbr.rel (0) target = $region33
    $region32: #{tpu_custom_call.1} parent=1 // pred_region
      %61 = dma.done [#allocation7], 8192
    $region33: #{tpu_custom_call.1} parent=1 // pred_fallthru
      _
    %p62 = scmp.eq.s32.totalorder 0, 0
    // Predicated region
    $region34: #{tpu_custom_call.1} parent=1 // pred_check
      %p63 = pneg %p62
    $region35: #{tpu_custom_call.1} parent=1 // pred_check_branch
      %65 = sbr.rel (%p63) target = $region37
    $region36: #{tpu_custom_call.1} parent=1 // pred_region
      %66 = vst [vmem:[#allocation2] sm:$0xff] 0.0
      %67 = vst [vmem:[#allocation2 + $0x8] sm:$0xff] 0.0
    $region37: #{tpu_custom_call.1} parent=1 // pred_fallthru
      _
    %v68 = vld [vmem:[#allocation3] sm:$0xff]
    %v69 = vld [vmem:[#allocation3 + $0x8] sm:$0xff]
    %v70 = vld [vmem:[#allocation6] sm:$0xff]
    %v71 = vld [vmem:[#allocation6 + $0x8] sm:$0xff]
    %v72 = vld [vmem:[#allocation6 + $0x10] sm:$0xff]
    %v73 = vld [vmem:[#allocation6 + $0x18] sm:$0xff]
    %v74 = vld [vmem:[#allocation6 + $0x20] sm:$0xff]
    %v75 = vld [vmem:[#allocation6 + $0x28] sm:$0xff]
    %v76 = vld [vmem:[#allocation6 + $0x30] sm:$0xff]
    %v77 = vld [vmem:[#allocation6 + $0x38] sm:$0xff]
    %v78 = vld [vmem:[#allocation6 + $0x40] sm:$0xff]
    %v79 = vld [vmem:[#allocation6 + $0x48] sm:$0xff]
    %v80 = vld [vmem:[#allocation6 + $0x50] sm:$0xff]
    %v81 = vld [vmem:[#allocation6 + $0x58] sm:$0xff]
    %v82 = vld [vmem:[#allocation6 + $0x60] sm:$0xff]
    %v83 = vld [vmem:[#allocation6 + $0x68] sm:$0xff]
    %v84 = vld [vmem:[#allocation6 + $0x70] sm:$0xff]
    %v85 = vld [vmem:[#allocation6 + $0x78] sm:$0xff]
    %v86 = vld [vmem:[#allocation6 + $0x80] sm:$0xff]
    %v87 = vld [vmem:[#allocation6 + $0x88] sm:$0xff]
    %v88 = vld [vmem:[#allocation6 + $0x90] sm:$0xff]
    %v89 = vld [vmem:[#allocation6 + $0x98] sm:$0xff]
    %v90 = vld [vmem:[#allocation6 + $0xa0] sm:$0xff]
    %v91 = vld [vmem:[#allocation6 + $0xa8] sm:$0xff]
    %v92 = vld [vmem:[#allocation6 + $0xb0] sm:$0xff]
    %v93 = vld [vmem:[#allocation6 + $0xb8] sm:$0xff]
    %v94 = vld [vmem:[#allocation6 + $0xc0] sm:$0xff]
    %v95 = vld [vmem:[#allocation6 + $0xc8] sm:$0xff]
    %v96 = vld [vmem:[#allocation6 + $0xd0] sm:$0xff]
    %v97 = vld [vmem:[#allocation6 + $0xd8] sm:$0xff]
    %v98 = vld [vmem:[#allocation6 + $0xe0] sm:$0xff]
    %v99 = vld [vmem:[#allocation6 + $0xe8] sm:$0xff]
    %v100 = vld [vmem:[#allocation6 + $0xf0] sm:$0xff]
    %v101 = vld [vmem:[#allocation6 + $0xf8] sm:$0xff]
    %v102 = vld [vmem:[#allocation6 + $0x100] sm:$0xff]
    %v103 = vld [vmem:[#allocation6 + $0x108] sm:$0xff]
    %v104 = vld [vmem:[#allocation6 + $0x110] sm:$0xff]
    %v105 = vld [vmem:[#allocation6 + $0x118] sm:$0xff]
    %v106 = vld [vmem:[#allocation6 + $0x120] sm:$0xff]
    %v107 = vld [vmem:[#allocation6 + $0x128] sm:$0xff]
    %v108 = vld [vmem:[#allocation6 + $0x130] sm:$0xff]
    %v109 = vld [vmem:[#allocation6 + $0x138] sm:$0xff]
    %v110 = vld [vmem:[#allocation6 + $0x140] sm:$0xff]
    %v111 = vld [vmem:[#allocation6 + $0x148] sm:$0xff]
    %v112 = vld [vmem:[#allocation6 + $0x150] sm:$0xff]
    %v113 = vld [vmem:[#allocation6 + $0x158] sm:$0xff]
    %v114 = vld [vmem:[#allocation6 + $0x160] sm:$0xff]
    %v115 = vld [vmem:[#allocation6 + $0x168] sm:$0xff]
    %v116 = vld [vmem:[#allocation6 + $0x170] sm:$0xff]
    %v117 = vld [vmem:[#allocation6 + $0x178] sm:$0xff]
    %v118 = vld [vmem:[#allocation6 + $0x180] sm:$0xff]
    %v119 = vld [vmem:[#allocation6 + $0x188] sm:$0xff]
    %v120 = vld [vmem:[#allocation6 + $0x190] sm:$0xff]
    %v121 = vld [vmem:[#allocation6 + $0x198] sm:$0xff]
    %v122 = vld [vmem:[#allocation6 + $0x1a0] sm:$0xff]
    %v123 = vld [vmem:[#allocation6 + $0x1a8] sm:$0xff]
    %v124 = vld [vmem:[#allocation6 + $0x1b0] sm:$0xff]
    %v125 = vld [vmem:[#allocation6 + $0x1b8] sm:$0xff]
    %v126 = vld [vmem:[#allocation6 + $0x1c0] sm:$0xff]
    %v127 = vld [vmem:[#allocation6 + $0x1c8] sm:$0xff]
    %v128 = vld [vmem:[#allocation6 + $0x1d0] sm:$0xff]
    %v129 = vld [vmem:[#allocation6 + $0x1d8] sm:$0xff]
    %v130 = vld [vmem:[#allocation6 + $0x1e0] sm:$0xff]
    %v131 = vld [vmem:[#allocation6 + $0x1e8] sm:$0xff]
    %v132 = vld [vmem:[#allocation6 + $0x1f0] sm:$0xff]
    %v133 = vld [vmem:[#allocation6 + $0x1f8] sm:$0xff]
    %v134 = vld [vmem:[%s2] sm:$0xf]
    %v136 = vlaneseq
    %v137 = vshrl.u32 %v136, 7
    %v138 = vsub.s32 0, %v137
    %v139 = vrot.slane %v134, %v138
    %v140 = vlaneseq
    %v141 = vshrl.u32 %v140, 7
    %v142 = vsub.s32 1, %v141
    %v143 = vrot.slane %v134, %v142
    %v144 = vlaneseq
    %v145 = vshrl.u32 %v144, 7
    %v146 = vsub.s32 2, %v145
    %v147 = vrot.slane %v134, %v146
    %v148 = vlaneseq
    %v149 = vshrl.u32 %v148, 7
    %v150 = vsub.s32 3, %v149
    %v151 = vrot.slane %v134, %v150
    %156 = vmatprep.subr.mxu0 %v71
    %157 = vmatpush1.msra.mxu0 %v70
    %158 = vmatprep.subr.mxu0 %v75
    %159 = vmatpush1.msra.mxu0 %v74
    %160 = vmatprep.subr.mxu0 %v79
    %161 = vmatpush1.msra.mxu0 %v78
    %162 = vmatprep.subr.mxu0 %v83
    %163 = vmatpush1.msra.mxu0 %v82
    %164 = vmatprep.subr.mxu0 %v87
    %165 = vmatpush1.msra.mxu0 %v86
    %166 = vmatprep.subr.mxu0 %v91
    %167 = vmatpush1.msra.mxu0 %v90
    %168 = vmatprep.subr.mxu0 %v95
    %169 = vmatpush1.msra.mxu0 %v94
    %170 = vmatprep.subr.mxu0 %v99
    %171 = vmatpush1.msra.mxu0 %v98
    %172 = vmatprep.subr.mxu0 %v103
    %173 = vmatpush1.msra.mxu0 %v102
    %174 = vmatprep.subr.mxu0 %v107
    %175 = vmatpush1.msra.mxu0 %v106
    %176 = vmatprep.subr.mxu0 %v111
    %177 = vmatpush1.msra.mxu0 %v110
    %178 = vmatprep.subr.mxu0 %v115
    %179 = vmatpush1.msra.mxu0 %v114
    %180 = vmatprep.subr.mxu0 %v119
    %181 = vmatpush1.msra.mxu0 %v118
    %182 = vmatprep.subr.mxu0 %v123
    %183 = vmatpush1.msra.mxu0 %v122
    %184 = vmatprep.subr.mxu0 %v127
    %185 = vmatpush1.msra.mxu0 %v126
    %186 = vmatprep.subr.mxu0 %v131
    %187 = vmatpush1.msra.mxu0 %v130
    %188 = vmatprep.subr.mxu0 0.0
    %189 = vmatpush1.msra.mxu0 0.0
    %190 = vmatprep.subr.mxu0 0.0
    %191 = vmatpush1.msra.mxu0 0.0
    %192 = vmatprep.subr.mxu0 0.0
    %193 = vmatpush1.msra.mxu0 0.0
    %194 = vmatprep.subr.mxu0 0.0
    %195 = vmatpush1.msra.mxu0 0.0
    %196 = vmatprep.subr.mxu0 0.0
    %197 = vmatpush1.msra.mxu0 0.0
    %198 = vmatprep.subr.mxu0 0.0
    %199 = vmatpush1.msra.mxu0 0.0
    %200 = vmatprep.subr.mxu0 0.0
    %201 = vmatpush1.msra.mxu0 0.0
    %202 = vmatprep.subr.mxu0 0.0
    %203 = vmatpush1.msra.mxu0 0.0
    %204 = vmatprep.subr.mxu0 0.0
    %205 = vmatpush1.msra.mxu0 0.0
    %206 = vmatprep.subr.mxu0 0.0
    %207 = vmatpush1.msra.mxu0 0.0
    %208 = vmatprep.subr.mxu0 0.0
    %209 = vmatpush1.msra.mxu0 0.0
    %210 = vmatprep.subr.mxu0 0.0
    %211 = vmatpush1.msra.mxu0 0.0
    %212 = vmatprep.subr.mxu0 0.0
    %213 = vmatpush1.msra.mxu0 0.0
    %214 = vmatprep.subr.mxu0 0.0
    %215 = vmatpush1.msra.mxu0 0.0
    %216 = vmatprep.subr.mxu0 0.0
    %217 = vmatpush1.msra.mxu0 0.0
    %218 = vmatprep.subr.mxu0 0.0
    %219 = vmatpush1.msra.mxu0 0.0
    %220 = vmatprep.mubr.f32.mxu0 0.0
    %221 = vmatmul.mubr.f32.gmra.mrb[0].mxu0 %v68
    %v222 = vpop.f32.mrb[0].mxu0
    %v223 = vadd.f32 %v139, %v222
    %v224 = vpop.f32.mrb[0].mxu0
    %v225 = vadd.f32 %v143, %v224
    %226 = vmatprep.mubr.f32.mxu0 0.0
    %227 = vmatmul.mubr.f32.gmra.mrb[0].mxu0 %v69
    %v228 = vpop.f32.mrb[0].mxu0
    %v229 = vadd.f32 %v139, %v228
    %v230 = vpop.f32.mrb[0].mxu0
    %v231 = vadd.f32 %v143, %v230
    %232 = vdwg.mxu0
    %233 = vmatprep.subr.mxu0 %v73
    %234 = vmatpush1.msra.mxu0 %v72
    %235 = vmatprep.subr.mxu0 %v77
    %236 = vmatpush1.msra.mxu0 %v76
    %237 = vmatprep.subr.mxu0 %v81
    %238 = vmatpush1.msra.mxu0 %v80
    %239 = vmatprep.subr.mxu0 %v85
    %240 = vmatpush1.msra.mxu0 %v84
    %241 = vmatprep.subr.mxu0 %v89
    %242 = vmatpush1.msra.mxu0 %v88
    %243 = vmatprep.subr.mxu0 %v93
    %244 = vmatpush1.msra.mxu0 %v92
    %245 = vmatprep.subr.mxu0 %v97
    %246 = vmatpush1.msra.mxu0 %v96
    %247 = vmatprep.subr.mxu0 %v101
    %248 = vmatpush1.msra.mxu0 %v100
    %249 = vmatprep.subr.mxu0 %v105
    %250 = vmatpush1.msra.mxu0 %v104
    %251 = vmatprep.subr.mxu0 %v109
    %252 = vmatpush1.msra.mxu0 %v108
    %253 = vmatprep.subr.mxu0 %v113
    %254 = vmatpush1.msra.mxu0 %v112
    %255 = vmatprep.subr.mxu0 %v117
    %256 = vmatpush1.msra.mxu0 %v116
    %257 = vmatprep.subr.mxu0 %v121
    %258 = vmatpush1.msra.mxu0 %v120
    %259 = vmatprep.subr.mxu0 %v125
    %260 = vmatpush1.msra.mxu0 %v124
    %261 = vmatprep.subr.mxu0 %v129
    %262 = vmatpush1.msra.mxu0 %v128
    %263 = vmatprep.subr.mxu0 %v133
    %264 = vmatpush1.msra.mxu0 %v132
    %265 = vmatprep.subr.mxu0 0.0
    %266 = vmatpush1.msra.mxu0 0.0
    %267 = vmatprep.subr.mxu0 0.0
    %268 = vmatpush1.msra.mxu0 0.0
    %269 = vmatprep.subr.mxu0 0.0
    %270 = vmatpush1.msra.mxu0 0.0
    %271 = vmatprep.subr.mxu0 0.0
    %272 = vmatpush1.msra.mxu0 0.0
    %273 = vmatprep.subr.mxu0 0.0
    %274 = vmatpush1.msra.mxu0 0.0
    %275 = vmatprep.subr.mxu0 0.0
    %276 = vmatpush1.msra.mxu0 0.0
    %277 = vmatprep.subr.mxu0 0.0
    %278 = vmatpush1.msra.mxu0 0.0
    %279 = vmatprep.subr.mxu0 0.0
    %280 = vmatpush1.msra.mxu0 0.0
    %281 = vmatprep.subr.mxu0 0.0
    %282 = vmatpush1.msra.mxu0 0.0
    %283 = vmatprep.subr.mxu0 0.0
    %284 = vmatpush1.msra.mxu0 0.0
    %285 = vmatprep.subr.mxu0 0.0
    %286 = vmatpush1.msra.mxu0 0.0
    %287 = vmatprep.subr.mxu0 0.0
    %288 = vmatpush1.msra.mxu0 0.0
    %289 = vmatprep.subr.mxu0 0.0
    %290 = vmatpush1.msra.mxu0 0.0
    %291 = vmatprep.subr.mxu0 0.0
    %292 = vmatpush1.msra.mxu0 0.0
    %293 = vmatprep.subr.mxu0 0.0
    %294 = vmatpush1.msra.mxu0 0.0
    %295 = vmatprep.subr.mxu0 0.0
    %296 = vmatpush1.msra.mxu0 0.0
    %297 = vmatprep.mubr.f32.mxu0 0.0
    %298 = vmatmul.mubr.f32.gmra.mrb[0].mxu0 %v68
    %v299 = vpop.f32.mrb[0].mxu0
    %v300 = vadd.f32 %v147, %v299
    %v301 = vpop.f32.mrb[0].mxu0
    %v302 = vadd.f32 %v151, %v301
    %303 = vmatprep.mubr.f32.mxu0 0.0
    %304 = vmatmul.mubr.f32.gmra.mrb[0].mxu0 %v69
    %v305 = vpop.f32.mrb[0].mxu0
    %v306 = vadd.f32 %v147, %v305
    %v307 = vpop.f32.mrb[0].mxu0
    %v308 = vadd.f32 %v151, %v307
    %309 = vdwg.mxu0
    %v310 = vmax.f32 %v223, 0.0
    %v311 = vmax.f32 %v225, 0.0
    %v312 = vmax.f32 %v300, 0.0
    %v313 = vmax.f32 %v302, 0.0
    %v314 = vmax.f32 %v229, 0.0
    %v315 = vmax.f32 %v231, 0.0
    %v316 = vmax.f32 %v306, 0.0
    %v317 = vmax.f32 %v308, 0.0
    %v318 = vld [vmem:[#allocation2] sm:$0xff]
    %v319 = vld [vmem:[#allocation2 + $0x8] sm:$0xff]
    %v320 = vld [vmem:[#allocation8] sm:$0xff]
    %v321 = vld [vmem:[#allocation8 + $0x8] sm:$0xff]
    %v322 = vld [vmem:[#allocation8 + $0x10] sm:$0xff]
    %v323 = vld [vmem:[#allocation8 + $0x18] sm:$0xff]
    %v324 = vld [vmem:[#allocation8 + $0x20] sm:$0xff]
    %v325 = vld [vmem:[#allocation8 + $0x28] sm:$0xff]
    %v326 = vld [vmem:[#allocation8 + $0x30] sm:$0xff]
    %v327 = vld [vmem:[#allocation8 + $0x38] sm:$0xff]
    %v328 = vld [vmem:[#allocation8 + $0x40] sm:$0xff]
    %v329 = vld [vmem:[#allocation8 + $0x48] sm:$0xff]
    %v330 = vld [vmem:[#allocation8 + $0x50] sm:$0xff]
    %v331 = vld [vmem:[#allocation8 + $0x58] sm:$0xff]
    %v332 = vld [vmem:[#allocation8 + $0x60] sm:$0xff]
    %v333 = vld [vmem:[#allocation8 + $0x68] sm:$0xff]
    %v334 = vld [vmem:[#allocation8 + $0x70] sm:$0xff]
    %v335 = vld [vmem:[#allocation8 + $0x78] sm:$0xff]
    %v336 = vld [vmem:[#allocation8 + $0x80] sm:$0xff]
    %v337 = vld [vmem:[#allocation8 + $0x88] sm:$0xff]
    %v338 = vld [vmem:[#allocation8 + $0x90] sm:$0xff]
    %v339 = vld [vmem:[#allocation8 + $0x98] sm:$0xff]
    %v340 = vld [vmem:[#allocation8 + $0xa0] sm:$0xff]
    %v341 = vld [vmem:[#allocation8 + $0xa8] sm:$0xff]
    %v342 = vld [vmem:[#allocation8 + $0xb0] sm:$0xff]
    %v343 = vld [vmem:[#allocation8 + $0xb8] sm:$0xff]
    %v344 = vld [vmem:[#allocation8 + $0xc0] sm:$0xff]
    %v345 = vld [vmem:[#allocation8 + $0xc8] sm:$0xff]
    %v346 = vld [vmem:[#allocation8 + $0xd0] sm:$0xff]
    %v347 = vld [vmem:[#allocation8 + $0xd8] sm:$0xff]
    %v348 = vld [vmem:[#allocation8 + $0xe0] sm:$0xff]
    %v349 = vld [vmem:[#allocation8 + $0xe8] sm:$0xff]
    %v350 = vld [vmem:[#allocation8 + $0xf0] sm:$0xff]
    %v351 = vld [vmem:[#allocation8 + $0xf8] sm:$0xff]
    %v352 = vld [vmem:[#allocation8 + $0x100] sm:$0xff]
    %v353 = vld [vmem:[#allocation8 + $0x108] sm:$0xff]
    %v354 = vld [vmem:[#allocation8 + $0x110] sm:$0xff]
    %v355 = vld [vmem:[#allocation8 + $0x118] sm:$0xff]
    %v356 = vld [vmem:[#allocation8 + $0x120] sm:$0xff]
    %v357 = vld [vmem:[#allocation8 + $0x128] sm:$0xff]
    %v358 = vld [vmem:[#allocation8 + $0x130] sm:$0xff]
    %v359 = vld [vmem:[#allocation8 + $0x138] sm:$0xff]
    %v360 = vld [vmem:[#allocation8 + $0x140] sm:$0xff]
    %v361 = vld [vmem:[#allocation8 + $0x148] sm:$0xff]
    %v362 = vld [vmem:[#allocation8 + $0x150] sm:$0xff]
    %v363 = vld [vmem:[#allocation8 + $0x158] sm:$0xff]
    %v364 = vld [vmem:[#allocation8 + $0x160] sm:$0xff]
    %v365 = vld [vmem:[#allocation8 + $0x168] sm:$0xff]
    %v366 = vld [vmem:[#allocation8 + $0x170] sm:$0xff]
    %v367 = vld [vmem:[#allocation8 + $0x178] sm:$0xff]
    %v368 = vld [vmem:[#allocation8 + $0x180] sm:$0xff]
    %v369 = vld [vmem:[#allocation8 + $0x188] sm:$0xff]
    %v370 = vld [vmem:[#allocation8 + $0x190] sm:$0xff]
    %v371 = vld [vmem:[#allocation8 + $0x198] sm:$0xff]
    %v372 = vld [vmem:[#allocation8 + $0x1a0] sm:$0xff]
    %v373 = vld [vmem:[#allocation8 + $0x1a8] sm:$0xff]
    %v374 = vld [vmem:[#allocation8 + $0x1b0] sm:$0xff]
    %v375 = vld [vmem:[#allocation8 + $0x1b8] sm:$0xff]
    %v376 = vld [vmem:[#allocation8 + $0x1c0] sm:$0xff]
    %v377 = vld [vmem:[#allocation8 + $0x1c8] sm:$0xff]
    %v378 = vld [vmem:[#allocation8 + $0x1d0] sm:$0xff]
    %v379 = vld [vmem:[#allocation8 + $0x1d8] sm:$0xff]
    %v380 = vld [vmem:[#allocation8 + $0x1e0] sm:$0xff]
    %v381 = vld [vmem:[#allocation8 + $0x1e8] sm:$0xff]
    %v382 = vld [vmem:[#allocation8 + $0x1f0] sm:$0xff]
    %v383 = vld [vmem:[#allocation8 + $0x1f8] sm:$0xff]
    %384 = vmatprep.subr.mxu0 0.0
    %385 = vmatpush1.msra.mxu0 %v320
    %386 = vmatprep.subr.mxu0 0.0
    %387 = vmatpush1.msra.mxu0 %v321
    %388 = vmatprep.subr.mxu0 0.0
    %389 = vmatpush1.msra.mxu0 %v322
    %390 = vmatprep.subr.mxu0 0.0
    %391 = vmatpush1.msra.mxu0 %v323
    %392 = vmatprep.subr.mxu0 0.0
    %393 = vmatpush1.msra.mxu0 %v324
    %394 = vmatprep.subr.mxu0 0.0
    %395 = vmatpush1.msra.mxu0 %v325
    %396 = vmatprep.subr.mxu0 0.0
    %397 = vmatpush1.msra.mxu0 %v326
    %398 = vmatprep.subr.mxu0 0.0
    %399 = vmatpush1.msra.mxu0 %v327
    %400 = vmatprep.subr.mxu0 0.0
    %401 = vmatpush1.msra.mxu0 %v328
    %402 = vmatprep.subr.mxu0 0.0
    %403 = vmatpush1.msra.mxu0 %v329
    %404 = vmatprep.subr.mxu0 0.0
    %405 = vmatpush1.msra.mxu0 %v330
    %406 = vmatprep.subr.mxu0 0.0
    %407 = vmatpush1.msra.mxu0 %v331
    %408 = vmatprep.subr.mxu0 0.0
    %409 = vmatpush1.msra.mxu0 %v332
    %410 = vmatprep.subr.mxu0 0.0
    %411 = vmatpush1.msra.mxu0 %v333
    %412 = vmatprep.subr.mxu0 0.0
    %413 = vmatpush1.msra.mxu0 %v334
    %414 = vmatprep.subr.mxu0 0.0
    %415 = vmatpush1.msra.mxu0 %v335
    %416 = vmatprep.subr.mxu0 0.0
    %417 = vmatpush1.msra.mxu0 %v336
    %418 = vmatprep.subr.mxu0 0.0
    %419 = vmatpush1.msra.mxu0 %v337
    %420 = vmatprep.subr.mxu0 0.0
    %421 = vmatpush1.msra.mxu0 %v338
    %422 = vmatprep.subr.mxu0 0.0
    %423 = vmatpush1.msra.mxu0 %v339
    %424 = vmatprep.subr.mxu0 0.0
    %425 = vmatpush1.msra.mxu0 %v340
    %426 = vmatprep.subr.mxu0 0.0
    %427 = vmatpush1.msra.mxu0 %v341
    %428 = vmatprep.subr.mxu0 0.0
    %429 = vmatpush1.msra.mxu0 %v342
    %430 = vmatprep.subr.mxu0 0.0
    %431 = vmatpush1.msra.mxu0 %v343
    %432 = vmatprep.subr.mxu0 0.0
    %433 = vmatpush1.msra.mxu0 %v344
    %434 = vmatprep.subr.mxu0 0.0
    %435 = vmatpush1.msra.mxu0 %v345
    %436 = vmatprep.subr.mxu0 0.0
    %437 = vmatpush1.msra.mxu0 %v346
    %438 = vmatprep.subr.mxu0 0.0
    %439 = vmatpush1.msra.mxu0 %v347
    %440 = vmatprep.subr.mxu0 0.0
    %441 = vmatpush1.msra.mxu0 %v348
    %442 = vmatprep.subr.mxu0 0.0
    %443 = vmatpush1.msra.mxu0 %v349
    %444 = vmatprep.subr.mxu0 0.0
    %445 = vmatpush1.msra.mxu0 %v350
    %446 = vmatprep.subr.mxu0 0.0
    %447 = vmatpush1.msra.mxu0 %v351
    %448 = vmatprep.mubr.f32.mxu0 %v311
    %449 = vmatmul.mubr.f32.gmra.mrb[0].mxu0 %v310
    %v450 = vpop.f32.mrb[0].mxu0
    %v451 = vadd.f32 0.0, %v450
    %v452 = vpop.f32.mrb[0].mxu0
    %453 = vmatprep.mubr.f32.mxu0 %v315
    %454 = vmatmul.mubr.f32.gmra.mrb[0].mxu0 %v314
    %v455 = vpop.f32.mrb[0].mxu0
    %v456 = vadd.f32 0.0, %v455
    %v457 = vpop.f32.mrb[0].mxu0
    %458 = vdwg.mxu0
    %459 = vmatprep.subr.mxu0 0.0
    %460 = vmatpush1.msra.mxu0 %v352
    %461 = vmatprep.subr.mxu0 0.0
    %462 = vmatpush1.msra.mxu0 %v353
    %463 = vmatprep.subr.mxu0 0.0
    %464 = vmatpush1.msra.mxu0 %v354
    %465 = vmatprep.subr.mxu0 0.0
    %466 = vmatpush1.msra.mxu0 %v355
    %467 = vmatprep.subr.mxu0 0.0
    %468 = vmatpush1.msra.mxu0 %v356
    %469 = vmatprep.subr.mxu0 0.0
    %470 = vmatpush1.msra.mxu0 %v357
    %471 = vmatprep.subr.mxu0 0.0
    %472 = vmatpush1.msra.mxu0 %v358
    %473 = vmatprep.subr.mxu0 0.0
    %474 = vmatpush1.msra.mxu0 %v359
    %475 = vmatprep.subr.mxu0 0.0
    %476 = vmatpush1.msra.mxu0 %v360
    %477 = vmatprep.subr.mxu0 0.0
    %478 = vmatpush1.msra.mxu0 %v361
    %479 = vmatprep.subr.mxu0 0.0
    %480 = vmatpush1.msra.mxu0 %v362
    %481 = vmatprep.subr.mxu0 0.0
    %482 = vmatpush1.msra.mxu0 %v363
    %483 = vmatprep.subr.mxu0 0.0
    %484 = vmatpush1.msra.mxu0 %v364
    %485 = vmatprep.subr.mxu0 0.0
    %486 = vmatpush1.msra.mxu0 %v365
    %487 = vmatprep.subr.mxu0 0.0
    %488 = vmatpush1.msra.mxu0 %v366
    %489 = vmatprep.subr.mxu0 0.0
    %490 = vmatpush1.msra.mxu0 %v367
    %491 = vmatprep.subr.mxu0 0.0
    %492 = vmatpush1.msra.mxu0 %v368
    %493 = vmatprep.subr.mxu0 0.0
    %494 = vmatpush1.msra.mxu0 %v369
    %495 = vmatprep.subr.mxu0 0.0
    %496 = vmatpush1.msra.mxu0 %v370
    %497 = vmatprep.subr.mxu0 0.0
    %498 = vmatpush1.msra.mxu0 %v371
    %499 = vmatprep.subr.mxu0 0.0
    %500 = vmatpush1.msra.mxu0 %v372
    %501 = vmatprep.subr.mxu0 0.0
    %502 = vmatpush1.msra.mxu0 %v373
    %503 = vmatprep.subr.mxu0 0.0
    %504 = vmatpush1.msra.mxu0 %v374
    %505 = vmatprep.subr.mxu0 0.0
    %506 = vmatpush1.msra.mxu0 %v375
    %507 = vmatprep.subr.mxu0 0.0
    %508 = vmatpush1.msra.mxu0 %v376
    %509 = vmatprep.subr.mxu0 0.0
    %510 = vmatpush1.msra.mxu0 %v377
    %511 = vmatprep.subr.mxu0 0.0
    %512 = vmatpush1.msra.mxu0 %v378
    %513 = vmatprep.subr.mxu0 0.0
    %514 = vmatpush1.msra.mxu0 %v379
    %515 = vmatprep.subr.mxu0 0.0
    %516 = vmatpush1.msra.mxu0 %v380
    %517 = vmatprep.subr.mxu0 0.0
    %518 = vmatpush1.msra.mxu0 %v381
    %519 = vmatprep.subr.mxu0 0.0
    %520 = vmatpush1.msra.mxu0 %v382
    %521 = vmatprep.subr.mxu0 0.0
    %522 = vmatpush1.msra.mxu0 %v383
    %523 = vmatprep.mubr.f32.mxu0 %v313
    %524 = vmatmul.mubr.f32.gmra.mrb[0].mxu0 %v312
    %v525 = vpop.f32.mrb[0].mxu0
    %v526 = vadd.f32 %v451, %v525
    %v527 = vpop.f32.mrb[0].mxu0
    %528 = vmatprep.mubr.f32.mxu0 %v317
    %529 = vmatmul.mubr.f32.gmra.mrb[0].mxu0 %v316
    %v530 = vpop.f32.mrb[0].mxu0
    %v531 = vadd.f32 %v456, %v530
    %v532 = vpop.f32.mrb[0].mxu0
    %533 = vdwg.mxu0
    %v534 = vadd.f32 %v318, %v526
    %v535 = vadd.f32 %v319, %v531
    %536 = vst [vmem:[#allocation2] sm:$0xff] %v534
    %537 = vst [vmem:[#allocation2 + $0x8] sm:$0xff] %v535
    // Predicated region
    $region38: #{tpu_custom_call.1} parent=1 // pred_check
      %p538 = pneg %p62
    $region39: #{tpu_custom_call.1} parent=1 // pred_check_branch
      %540 = sbr.rel (%p538) target = $region41
    $region40: #{tpu_custom_call.1} parent=1 // pred_region
      %v541 = vld [vmem:[#allocation2] sm:$0xff]
      %v542 = vld [vmem:[#allocation2 + $0x8] sm:$0xff]
      %v543 = vld [vmem:[%s4] sm:$0x1]
      %v545 = vlaneseq
      %v546 = vshrl.u32 %v545, 7
      %v547 = vsub.s32 0, %v546
      %v548 = vrot.slane %v543, %v547
      %v550 = vadd.f32 %v541, %v548
      %v551 = vadd.f32 %v542, %v548
      %552 = vst [vmem:[#allocation9] sm:$0xff] %v550
      %553 = vst [vmem:[#allocation9 + $0x8] sm:$0xff] %v551
    $region41: #{tpu_custom_call.1} parent=1 // pred_fallthru
      _
    // Predicated region
    $region42: #{tpu_custom_call.1} parent=1 // pred_check
      _
    $region43: #{tpu_custom_call.1} parent=1 // pred_check_branch
      %555 = sbr.rel (0) target = $region45
    $region44: #{tpu_custom_call.1} parent=1 // pred_region
      %s557 = ssub.s32 256, 256
      %558 = vsyncadd [#allocation5], %s557
      %s559 = sshll.u32 [#allocation9], 4
      %s560 = int_to_ptr.vmem [resolvable:$true] %s559
      %565 = dma.vmem_to_hbm [thread:$0]  %s560, 256, %s5, [#allocation5], 128, 128, 8
    $region45: #{tpu_custom_call.1} parent=1 // pred_fallthru
      _
    // Predicated region
    $region46: #{tpu_custom_call.1} parent=1 // pred_check
      _
    $region47: #{tpu_custom_call.1} parent=1 // pred_check_branch
      %567 = sbr.rel (0) target = $region49
    $region48: #{tpu_custom_call.1} parent=1 // pred_region
      %568 = dma.done [#allocation5], 256
    $region49: #{tpu_custom_call.1} parent=1 // pred_fallthru
      _
    %569 = vsyncpa [#allocation4], 1
    %570 = vsyncpa [#allocation7], 1
    %571 = vsyncpa [#allocation5], 1

</llo_original>
